<compile_context>
chip_gen: v6e
topology: v6e:2x2x1
jax: 0.10.0
libtpu: 0.0.40
codegen_flags: <defaults>
</compile_context>

<pallas_src>
import jax
import jax.numpy as jnp
from jax.experimental import pallas as pl
from jax.experimental.pallas import tpu as pltpu


def _mean_agg_kernel(nodes_ref, m_ref, out_ref, cnt_ref):
    # nodes_ref: (1, Tmsg) int32 ; m_ref: (Tmsg, TD) M.dtype
    # out_ref:   (TN, TD) f32    ; cnt_ref: (TN, 1) f32
    i = pl.program_id(0)          # N-tile index
    j = pl.program_id(1)          # D-tile index
    k = pl.program_id(2)          # message (reduction) tile index
    tn = out_ref.shape[0]
    tmsg = m_ref.shape[0]

    @pl.when(k == 0)
    def _init_out():
        out_ref[...] = jnp.zeros_like(out_ref)

    @pl.when((k == 0) & (j == 0))
    def _init_cnt():
        cnt_ref[...] = jnp.zeros_like(cnt_ref)

    # Shift the (1, Tmsg) nodes row instead of the full (TN, Tmsg) iota.
    nodes_local = nodes_ref[...] - i * tn                              # (1, Tmsg)
    row_ids = jax.lax.broadcasted_iota(jnp.int32, (tn, tmsg), 0)
    match = row_ids == nodes_local                                     # (TN, Tmsg) bool
    selector = match.astype(m_ref.dtype)                               # exact 0/1

    # MXU matmul in M's native dtype, f32 accumulation into the resident
    # output block.
    out_ref[...] += jnp.dot(selector, m_ref[...],
                            preferred_element_type=jnp.float32)

    # Counts do not depend on the D-tile: only compute on the first D sweep.
    @pl.when(j == 0)
    def _count():
        cnt_ref[...] += jnp.sum(match.astype(jnp.float32), axis=1,
                                keepdims=True)

    @pl.when(k == pl.num_programs(2) - 1)
    def _finalize():
        counts = cnt_ref[...]
        inv = jnp.where(counts > 0.0, 1.0 / counts, 0.0)               # (TN, 1)
        out_ref[...] = out_ref[...] * inv                              # nan rows -> 0


def mean_message_aggregator(M, nodes, N, *, tn=256, td=512, tmsg=1024):
    """M: (num_messages, D), nodes: (num_messages,) int -> (N, D) float32."""
    n_msg, D = M.shape

    def rup(x, m):
        return ((x + m - 1) // m) * m

    # Tile sizes capped at the (aligned) problem size; multiples of (8, 128).
    tn_ = min(tn, rup(N, 8))
    td_ = min(td, rup(D, 128))
    tmsg_ = min(tmsg, rup(n_msg, 128))

    n_pad = rup(N, tn_)
    d_pad = rup(D, td_)
    k_pad = rup(n_msg, tmsg_)

    # Keep M in its native dtype (bf16 stays bf16 -> native MXU path); only pad.
    # Padded message slots get node id -1 so they never match any row.
    m_p = jnp.pad(M, ((0, k_pad - n_msg), (0, d_pad - D)))
    nodes_p = jnp.pad(nodes.astype(jnp.int32), (0, k_pad - n_msg),
                      constant_values=-1).reshape(1, k_pad)

    grid = (n_pad // tn_, d_pad // td_, k_pad // tmsg_)

    out = pl.pallas_call(
        _mean_agg_kernel,
        out_shape=jax.ShapeDtypeStruct((n_pad, d_pad), jnp.float32),
        grid_spec=pltpu.PrefetchScalarGridSpec(
            num_scalar_prefetch=0,
            grid=grid,
            in_specs=[
                pl.BlockSpec((1, tmsg_), lambda i, j, k: (0, k)),      # nodes
                pl.BlockSpec((tmsg_, td_), lambda i, j, k: (k, j)),    # M
            ],
            out_specs=pl.BlockSpec((tn_, td_), lambda i, j, k: (i, j)),
            scratch_shapes=[
                pltpu.VMEM((tn_, 1), jnp.float32),   # per-node message counts
            ],
        ),
        # Only the N-tile axis is "parallel": counts are gated to j==0 and
        # cnt_ref must see every (j, k) for a given i on the same core.
        compiler_params=pltpu.CompilerParams(
            dimension_semantics=("parallel", "arbitrary", "arbitrary")),
    )(nodes_p, m_p)

    return out[:N, :D]


def _reference(M, nodes, N):
    n_msg, D = M.shape
    sel = jnp.zeros((N, n_msg), jnp.float32).at[nodes, jnp.arange(n_msg)].set(1.0)
    counts = sel.sum(axis=1, keepdims=True)
    agg = (sel @ M.astype(jnp.float32)) / counts
    return jnp.where(jnp.isnan(agg), 0.0, agg)


if __name__ == "__main__":
    key = jax.random.PRNGKey(0)

    # Small case (matches the module's toy usage).
    k1, k2 = jax.random.split(key)
    N, n_msg, D = 32, 8, 32
    M = jax.random.normal(k1, (n_msg, D), dtype=jnp.float32)
    nodes = jax.random.randint(k2, (n_msg,), 0, N, dtype=jnp.int32)

    out = jax.block_until_ready(mean_message_aggregator(M, nodes, N))
    ref = _reference(M, nodes, N)
    assert out.shape == (N, D)
    assert jnp.allclose(out, ref, atol=1e-5, rtol=1e-5)

    # Larger case exercising padding + multi-tile grid (2 N-tiles, 2 message
    # reduction tiles) and the in-out accumulator init/finalize path plus the
    # j==0-gated count path.
    k3, k4 = jax.random.split(k2)
    N2, n_msg2, D2 = 300, 1030, 260
    M2 = jax.random.normal(k3, (n_msg2, D2), dtype=jnp.float32)
    nodes2 = jax.random.randint(k4, (n_msg2,), 0, N2, dtype=jnp.int32)

    out2 = jax.block_until_ready(mean_message_aggregator(M2, nodes2, N2))
    ref2 = _reference(M2, nodes2, N2)
    assert out2.shape == (N2, D2)
    assert jnp.allclose(out2, ref2, atol=1e-4, rtol=1e-4)

    # bf16 input path: M stays bf16 all the way to the MXU (native bf16 matmul
    # with f32 accumulation).  Compare against the f32 reference computed on
    # the bf16-rounded values -> only accumulation-order error remains.
    M2_bf16 = M2.astype(jnp.bfloat16)
    out3 = jax.block_until_ready(mean_message_aggregator(M2_bf16, nodes2, N2))
    ref3 = _reference(M2_bf16.astype(jnp.float32), nodes2, N2)
    assert out3.dtype == jnp.float32
    assert jnp.allclose(out3, ref3, atol=1e-4, rtol=1e-4)

    print("KERNEL_OK")
</pallas_src>

<mosaic_0001>
module attributes {stable_mosaic.version = 11 : i64} {
  func.func @_mean_agg_kernel(%arg0: i32, %arg1: i32, %arg2: i32, %arg3: memref<1x128xi32, #tpu.memory_space<vmem>>, %arg4: memref<128x128xf32, #tpu.memory_space<vmem>>, %arg5: memref<32x128xf32, #tpu.memory_space<vmem>>, %arg6: memref<32x1xf32, #tpu.memory_space<vmem>>) attributes {dimension_semantics = [#tpu.dimension_semantics<parallel>, #tpu.dimension_semantics<arbitrary>, #tpu.dimension_semantics<arbitrary>], iteration_bounds = array<i64: 1, 1, 1>, scalar_prefetch = 0 : i64, scratch_operands = 1 : i64, tpu.core_type = #tpu.core_type<tc>, window_params = [{transform_indices = @transform_0, window_bounds = array<i64: 1, 128>}, {transform_indices = @transform_1, window_bounds = array<i64: 128, 128>}, {transform_indices = @transform_2, window_bounds = array<i64: 32, 128>}]} {
    %c0_i32 = arith.constant 0 : i32
    %0 = arith.cmpi eq, %arg2, %c0_i32 : i32
    %1 = arith.extui %0 : i1 to i32
    %c0_i32_0 = arith.constant 0 : i32
    %2 = arith.cmpi ne, %1, %c0_i32_0 : i32
    scf.if %2 {
      %cst_15 = arith.constant 0.000000e+00 : f32
      %28 = vector.broadcast %cst_15 : f32 to vector<32x128xf32>
      %c0_16 = arith.constant 0 : index
      %c0_17 = arith.constant 0 : index
      %29 = vector.load %arg5[%c0_16, %c0_17] : memref<32x128xf32, #tpu.memory_space<vmem>>, vector<32x128xf32>
      tpu.vector_store %arg5[%c0_16, %c0_17], %28 {strides = array<i32>} : memref<32x128xf32, #tpu.memory_space<vmem>>, vector<32x128xf32>,
    } else {
    }
    %c0_i32_1 = arith.constant 0 : i32
    %3 = arith.cmpi eq, %arg2, %c0_i32_1 : i32
    %c0_i32_2 = arith.constant 0 : i32
    %4 = arith.cmpi eq, %arg1, %c0_i32_2 : i32
    %5 = arith.andi %3, %4 : i1
    %6 = arith.extui %5 : i1 to i32
    %c0_i32_3 = arith.constant 0 : i32
    %7 = arith.cmpi ne, %6, %c0_i32_3 : i32
    scf.if %7 {
      %cst_15 = arith.constant 0.000000e+00 : f32
      %28 = vector.broadcast %cst_15 : f32 to vector<32x1xf32>
      %c0_16 = arith.constant 0 : index
      %c0_17 = arith.constant 0 : index
      %29 = vector.load %arg6[%c0_16, %c0_17] : memref<32x1xf32, #tpu.memory_space<vmem>>, vector<32x1xf32>
      tpu.vector_store %arg6[%c0_16, %c0_17], %28 {strides = array<i32>} : memref<32x1xf32, #tpu.memory_space<vmem>>, vector<32x1xf32>,
    } else {
    }
    %c0 = arith.constant 0 : index
    %c0_4 = arith.constant 0 : index
    %8 = vector.load %arg3[%c0, %c0_4] : memref<1x128xi32, #tpu.memory_space<vmem>>, vector<1x128xi32>
    %c32_i32 = arith.constant 32 : i32
    %9 = arith.muli %arg0, %c32_i32 : i32
    %10 = vector.broadcast %9 : i32 to vector<1x128xi32>
    %11 = arith.subi %8, %10 : vector<1x128xi32>
    %12 = tpu.iota {dimensions = array<i32: 0>} : vector<32x128xi32>
    %13 = vector.broadcast %11 : vector<1x128xi32> to vector<32x128xi32>
    %14 = arith.cmpi eq, %12, %13 : vector<32x128xi32>
    %15 = arith.extui %14 : vector<32x128xi1> to vector<32x128xi32>
    %16 = arith.sitofp %15 : vector<32x128xi32> to vector<32x128xf32>
    %c0_5 = arith.constant 0 : index
    %c0_6 = arith.constant 0 : index
    %17 = vector.load %arg5[%c0_5, %c0_6] : memref<32x128xf32, #tpu.memory_space<vmem>>, vector<32x128xf32>
    %c0_7 = arith.constant 0 : index
    %c0_8 = arith.constant 0 : index
    %18 = vector.load %arg4[%c0_7, %c0_8] : memref<128x128xf32, #tpu.memory_space<vmem>>, vector<128x128xf32>
    %cst = arith.constant dense<0.000000e+00> : vector<32x128xf32>
    %19 = tpu.matmul %16, %18, %cst {dimension_numbers = #tpu.dot_dimension_numbers<[1], [0], [0], [1], [0, 0, 1, 1], [], []>} : vector<32x128xf32>, vector<128x128xf32>, vector<32x128xf32> -> vector<32x128xf32>
    %20 = arith.addf %17, %19 : vector<32x128xf32>
    %c0_9 = arith.constant 0 : index
    %c0_10 = arith.constant 0 : index
    %21 = vector.load %arg5[%c0_9, %c0_10] : memref<32x128xf32, #tpu.memory_space<vmem>>, vector<32x128xf32>
    tpu.vector_store %arg5[%c0_9, %c0_10], %20 {strides = array<i32>} : memref<32x128xf32, #tpu.memory_space<vmem>>, vector<32x128xf32>,
    %c0_i32_11 = arith.constant 0 : i32
    %22 = arith.cmpi eq, %arg1, %c0_i32_11 : i32
    %23 = arith.extui %22 : i1 to i32
    %c0_i32_12 = arith.constant 0 : i32
    %24 = arith.cmpi ne, %23, %c0_i32_12 : i32
    scf.if %24 {
      %c0_15 = arith.constant 0 : index
      %c0_16 = arith.constant 0 : index
      %28 = vector.load %arg6[%c0_15, %c0_16] : memref<32x1xf32, #tpu.memory_space<vmem>>, vector<32x1xf32>
      %29 = arith.extui %14 : vector<32x128xi1> to vector<32x128xi32>
      %30 = arith.sitofp %29 : vector<32x128xi32> to vector<32x128xf32>
      %cst_17 = arith.constant dense<0.000000e+00> : vector<32xf32>
      %31 = vector.multi_reduction <add>, %30, %cst_17 [1] : vector<32x128xf32> to vector<32xf32>
      %32 = vector.shape_cast %31 : vector<32xf32> to vector<32x1xf32>
      %33 = arith.addf %28, %32 : vector<32x1xf32>
      %c0_18 = arith.constant 0 : index
      %c0_19 = arith.constant 0 : index
      %34 = vector.load %arg6[%c0_18, %c0_19] : memref<32x1xf32, #tpu.memory_space<vmem>>, vector<32x1xf32>
      tpu.vector_store %arg6[%c0_18, %c0_19], %33 {strides = array<i32>} : memref<32x1xf32, #tpu.memory_space<vmem>>, vector<32x1xf32>,
    } else {
    }
    %c0_i32_13 = arith.constant 0 : i32
    %25 = arith.cmpi eq, %arg2, %c0_i32_13 : i32
    %26 = arith.extui %25 : i1 to i32
    %c0_i32_14 = arith.constant 0 : i32
    %27 = arith.cmpi ne, %26, %c0_i32_14 : i32
    scf.if %27 {
      %c0_15 = arith.constant 0 : index
      %c0_16 = arith.constant 0 : index
      %28 = vector.load %arg6[%c0_15, %c0_16] : memref<32x1xf32, #tpu.memory_space<vmem>>, vector<32x1xf32>
      %cst_17 = arith.constant 0.000000e+00 : f32
      %29 = vector.broadcast %cst_17 : f32 to vector<32x1xf32>
      %30 = arith.cmpf ogt, %28, %29 : vector<32x1xf32>
      %cst_18 = arith.constant 1.000000e+00 : f32
      %31 = vector.broadcast %cst_18 : f32 to vector<32x1xf32>
      %32 = arith.divf %31, %28 : vector<32x1xf32>
      %cst_19 = arith.constant 0.000000e+00 : f32
      %33 = vector.broadcast %cst_19 : f32 to vector<32x1xf32>
      %34 = arith.select %30, %32, %33 : vector<32x1xi1>, vector<32x1xf32>
      %c0_20 = arith.constant 0 : index
      %c0_21 = arith.constant 0 : index
      %35 = vector.load %arg5[%c0_20, %c0_21] : memref<32x128xf32, #tpu.memory_space<vmem>>, vector<32x128xf32>
      %36 = vector.broadcast %34 : vector<32x1xf32> to vector<32x128xf32>
      %37 = arith.mulf %35, %36 : vector<32x128xf32>
      %c0_22 = arith.constant 0 : index
      %c0_23 = arith.constant 0 : index
      %38 = vector.load %arg5[%c0_22, %c0_23] : memref<32x128xf32, #tpu.memory_space<vmem>>, vector<32x128xf32>
      tpu.vector_store %arg5[%c0_22, %c0_23], %37 {strides = array<i32>} : memref<32x128xf32, #tpu.memory_space<vmem>>, vector<32x128xf32>,
    } else {
    }
    return
  }
  func.func @transform_0(%arg0: i32, %arg1: i32, %arg2: i32) -> (i32, i32) {
    %c0_i32 = arith.constant 0 : i32
    %c0_i32_0 = arith.constant 0 : i32
    return %c0_i32, %arg2 : i32, i32
  }
  func.func @transform_1(%arg0: i32, %arg1: i32, %arg2: i32) -> (i32, i32) {
    %c0_i32 = arith.constant 0 : i32
    return %arg2, %arg1 : i32, i32
  }
  func.func @transform_2(%arg0: i32, %arg1: i32, %arg2: i32) -> (i32, i32) {
    %c0_i32 = arith.constant 0 : i32
    return %arg0, %arg1 : i32, i32
  }
}

</mosaic_0001>

<llo_original>
// kernel: tpu_custom_call.1
$region0: #{tpu_custom_call.1}
  #allocation0 [shape = 'u32[]', space=smem, size = 0x4, offset = 0x4, fixed_abs, tag = 'smem constant byte address 0x4 - core index']
  #allocation1 [shape = 'u32[144,128]{1,0:T(1,128)}', space=vmem, size = 0x12000, scoped, tag = 'internal scratch']
  #allocation2 [shape = 'f32[32,1]{1,0:T(8,128)}', space=vmem, size = 0x4000, scoped, tag = 'scratch operand']
  %s0 = inlined_call_operand.hbm [shape: s32[1,128], index: 0, kind: input, shape index: {}]
  %s1 = inlined_call_operand.hbm [shape: f32[128,128], index: 1, kind: input, shape index: {}]
  %s2 = inlined_call_operand.hbm [shape: f32[32,128], index: 2, kind: output, shape index: {}]
  %s3 = sld [smem:[#allocation0]]
  $region42: #{tpu_custom_call.1} parent=0
    _
  %s5 = ssub.s32 1, %s3
  %s6 = scalar_select 0, %s5, %s3
  $region1: #{tpu_custom_call.1} parent=0
    #allocation3 [shape = 'u8[512]{0}', space=vmem, size = 0x400, scoped, tag = 'input window, operand 0, single buffered']
    #allocation4 [shape = 's32[1]{0}', space=sflag, size = 0x4, scoped, tag = 'scoped memory for tpu_custom_call.1']
    #allocation5 [shape = 's32[1]{0}', space=sflag, size = 0x4, scoped, tag = 'scoped memory for tpu_custom_call.1']
    #allocation6 [shape = 'u8[65536]{0}', space=vmem, size = 0x10000, scoped, tag = 'input window, operand 1, single buffered']
    #allocation7 [shape = 's32[1]{0}', space=sflag, size = 0x4, scoped, tag = 'scoped memory for tpu_custom_call.1']
    #allocation8 [shape = 'u8[16384]{0}', space=vmem, size = 0x4000, scoped, tag = 'output window, operand 0, single buffered']
    %7 = vsyncpa [#allocation4], 0
    %8 = vsyncpa [#allocation7], 0
    %9 = vsyncpa [#allocation5], 0
    // Predicated region
    $region2: #{tpu_custom_call.1} parent=1 // pred_check
      _
    $region3: #{tpu_custom_call.1} parent=1 // pred_check_branch
      %11 = sbr.rel (0) target = $region5
    $region4: #{tpu_custom_call.1} parent=1 // pred_region
      %s13 = ssub.s32 16, 16
      %14 = vsyncadd [#allocation4], %s13
      %s16 = sshll.u32 [#allocation3], 4
      %s17 = int_to_ptr.vmem [resolvable:$true] %s16
      %19 = dma.hbm_to_vmem [thread:$0]  %s0, 16, %s17, [#allocation4]
    $region5: #{tpu_custom_call.1} parent=1 // pred_fallthru
      _
    // Predicated region
    $region6: #{tpu_custom_call.1} parent=1 // pred_check
      _
    $region7: #{tpu_custom_call.1} parent=1 // pred_check_branch
      %21 = sbr.rel (0) target = $region9
    $region8: #{tpu_custom_call.1} parent=1 // pred_region
      %s23 = ssub.s32 2048, 2048
      %24 = vsyncadd [#allocation7], %s23
      %s25 = sshll.u32 [#allocation6], 4
      %s26 = int_to_ptr.vmem [resolvable:$true] %s25
      %31 = dma.hbm_to_vmem [thread:$0]  %s1, 2048, %s26, [#allocation7], 128, 128, 8
    $region9: #{tpu_custom_call.1} parent=1 // pred_fallthru
      _
    // Predicated region
    $region10: #{tpu_custom_call.1} parent=1 // pred_check
      _
    $region11: #{tpu_custom_call.1} parent=1 // pred_check_branch
      %33 = sbr.rel (0) target = $region13
    $region12: #{tpu_custom_call.1} parent=1 // pred_region
      %34 = dma.done [#allocation4], 16
    $region13: #{tpu_custom_call.1} parent=1 // pred_fallthru
      _
    // Predicated region
    $region14: #{tpu_custom_call.1} parent=1 // pred_check
      _
    $region15: #{tpu_custom_call.1} parent=1 // pred_check_branch
      %36 = sbr.rel (0) target = $region17
    $region16: #{tpu_custom_call.1} parent=1 // pred_region
      %37 = dma.done [#allocation7], 2048
    $region17: #{tpu_custom_call.1} parent=1 // pred_fallthru
      _
    %p38 = scmp.eq.s32.totalorder 0, 0
    // Predicated region
    $region18: #{tpu_custom_call.1} parent=1 // pred_check
      %p39 = pneg %p38
    $region19: #{tpu_custom_call.1} parent=1 // pred_check_branch
      %41 = sbr.rel (%p39) target = $region21
    $region20: #{tpu_custom_call.1} parent=1 // pred_region
      %42 = vst [vmem:[#allocation8] sm:$0xff] 0.0
      %43 = vst [vmem:[#allocation8 + $0x8] sm:$0xff] 0.0
      %44 = vst [vmem:[#allocation8 + $0x10] sm:$0xff] 0.0
      %45 = vst [vmem:[#allocation8 + $0x18] sm:$0xff] 0.0
    $region21: #{tpu_custom_call.1} parent=1 // pred_fallthru
      _
    %p46 = scmp.eq.s32.totalorder 0, 0
    %p47 = pnand %p38, %p46
    %p48 = pneg %p47
    // Predicated region
    $region22: #{tpu_custom_call.1} parent=1 // pred_check
      _
    $region23: #{tpu_custom_call.1} parent=1 // pred_check_branch
      %50 = sbr.rel (%p47) target = $region25
    $region24: #{tpu_custom_call.1} parent=1 // pred_region
      %vm51 = vcmask 7168
      %52 = vst.msk [vmem:[#allocation2] sm:$0xff] %vm51, 0.0
      %53 = vst.msk [vmem:[#allocation2 + $0x8] sm:$0xff] %vm51, 0.0
      %54 = vst.msk [vmem:[#allocation2 + $0x10] sm:$0xff] %vm51, 0.0
      %55 = vst.msk [vmem:[#allocation2 + $0x18] sm:$0xff] %vm51, 0.0
    $region25: #{tpu_custom_call.1} parent=1 // pred_fallthru
      _
    %v56 = vld [vmem:[#allocation3] sm:$0x1]
    %s57 = smul.u32 0, 32
    %v58 = vstv %s57
    %v59 = vsub.s32 %v56, %v58
    %v60 = vlaneseq
    %v61 = vshrl.u32 %v60, 7
    %v62 = vadd.s32 %v61, 8
    %v63 = vadd.s32 %v61, 16
    %v64 = vadd.s32 %v61, 24
    %v65 = vlaneseq
    %v66 = vshrl.u32 %v65, 7
    %v67 = vsub.s32 0, %v66
    %v68 = vrot.slane %v59, %v67
    %vm69 = vcmp.eq.s32.totalorder %v61, %v68
    %vm70 = vcmp.eq.s32.totalorder %v62, %v68
    %vm71 = vcmp.eq.s32.totalorder %v63, %v68
    %vm72 = vcmp.eq.s32.totalorder %v64, %v68
    %v73 = vsel %vm69, 1, 0
    %v74 = vsel %vm70, 1, 0
    %v75 = vsel %vm71, 1, 0
    %v76 = vsel %vm72, 1, 0
    %v77 = vcvt.s32.f32 %v73
    %v78 = vcvt.s32.f32 %v74
    %v79 = vcvt.s32.f32 %v75
    %v80 = vcvt.s32.f32 %v76
    %v81 = vld [vmem:[#allocation8] sm:$0xff]
    %v82 = vld [vmem:[#allocation8 + $0x8] sm:$0xff]
    %v83 = vld [vmem:[#allocation8 + $0x10] sm:$0xff]
    %v84 = vld [vmem:[#allocation8 + $0x18] sm:$0xff]
    %v85 = vld [vmem:[#allocation6] sm:$0xff]
    %v86 = vld [vmem:[#allocation6 + $0x8] sm:$0xff]
    %v87 = vld [vmem:[#allocation6 + $0x10] sm:$0xff]
    %v88 = vld [vmem:[#allocation6 + $0x18] sm:$0xff]
    %v89 = vld [vmem:[#allocation6 + $0x20] sm:$0xff]
    %v90 = vld [vmem:[#allocation6 + $0x28] sm:$0xff]
    %v91 = vld [vmem:[#allocation6 + $0x30] sm:$0xff]
    %v92 = vld [vmem:[#allocation6 + $0x38] sm:$0xff]
    %v93 = vld [vmem:[#allocation6 + $0x40] sm:$0xff]
    %v94 = vld [vmem:[#allocation6 + $0x48] sm:$0xff]
    %v95 = vld [vmem:[#allocation6 + $0x50] sm:$0xff]
    %v96 = vld [vmem:[#allocation6 + $0x58] sm:$0xff]
    %v97 = vld [vmem:[#allocation6 + $0x60] sm:$0xff]
    %v98 = vld [vmem:[#allocation6 + $0x68] sm:$0xff]
    %v99 = vld [vmem:[#allocation6 + $0x70] sm:$0xff]
    %v100 = vld [vmem:[#allocation6 + $0x78] sm:$0xff]
    %101 = vmatprep.subr.mxu0 0.0
    %102 = vmatpush1.msra.mxu0 %v100
    %103 = vmatprep.subr.mxu0 0.0
    %104 = vmatpush1.msra.mxu0 %v99
    %105 = vmatprep.subr.mxu0 0.0
    %106 = vmatpush1.msra.mxu0 %v98
    %107 = vmatprep.subr.mxu0 0.0
    %108 = vmatpush1.msra.mxu0 %v97
    %109 = vmatprep.subr.mxu0 0.0
    %110 = vmatpush1.msra.mxu0 %v96
    %111 = vmatprep.subr.mxu0 0.0
    %112 = vmatpush1.msra.mxu0 %v95
    %113 = vmatprep.subr.mxu0 0.0
    %114 = vmatpush1.msra.mxu0 %v94
    %115 = vmatprep.subr.mxu0 0.0
    %116 = vmatpush1.msra.mxu0 %v93
    %117 = vmatprep.subr.mxu0 0.0
    %118 = vmatpush1.msra.mxu0 %v92
    %119 = vmatprep.subr.mxu0 0.0
    %120 = vmatpush1.msra.mxu0 %v91
    %121 = vmatprep.subr.mxu0 0.0
    %122 = vmatpush1.msra.mxu0 %v90
    %123 = vmatprep.subr.mxu0 0.0
    %124 = vmatpush1.msra.mxu0 %v89
    %125 = vmatprep.subr.mxu0 0.0
    %126 = vmatpush1.msra.mxu0 %v88
    %127 = vmatprep.subr.mxu0 0.0
    %128 = vmatpush1.msra.mxu0 %v87
    %129 = vmatprep.subr.mxu0 0.0
    %130 = vmatpush1.msra.mxu0 %v86
    %131 = vmatprep.subr.mxu0 0.0
    %132 = vmatpush1.msra.mxu0 %v85
    %133 = vmatprep.subr.mxu0 0.0
    %134 = vmatpush2.msra.mxu0 0.0
    %135 = vmatprep.subr.mxu0 0.0
    %136 = vmatpush2.msra.mxu0 0.0
    %137 = vmatprep.subr.mxu0 0.0
    %138 = vmatpush2.msra.mxu0 0.0
    %139 = vmatprep.subr.mxu0 0.0
    %140 = vmatpush2.msra.mxu0 0.0
    %141 = vmatprep.subr.mxu0 0.0
    %142 = vmatpush2.msra.mxu0 0.0
    %143 = vmatprep.subr.mxu0 0.0
    %144 = vmatpush2.msra.mxu0 0.0
    %145 = vmatprep.subr.mxu0 0.0
    %146 = vmatpush2.msra.mxu0 0.0
    %147 = vmatprep.subr.mxu0 0.0
    %148 = vmatpush2.msra.mxu0 0.0
    %149 = vmatprep.subr.mxu0 0.0
    %150 = vmatpush2.msra.mxu0 0.0
    %151 = vmatprep.subr.mxu0 0.0
    %152 = vmatpush2.msra.mxu0 0.0
    %153 = vmatprep.subr.mxu0 0.0
    %154 = vmatpush2.msra.mxu0 0.0
    %155 = vmatprep.subr.mxu0 0.0
    %156 = vmatpush2.msra.mxu0 0.0
    %157 = vmatprep.subr.mxu0 0.0
    %158 = vmatpush2.msra.mxu0 0.0
    %159 = vmatprep.subr.mxu0 0.0
    %160 = vmatpush2.msra.mxu0 0.0
    %161 = vmatprep.subr.mxu0 0.0
    %162 = vmatpush2.msra.mxu0 0.0
    %163 = vmatprep.subr.mxu0 0.0
    %164 = vmatpush2.msra.mxu0 0.0
    %165 = vmatprep.mubr.f32.mxu0 0.0
    %166 = vmatmul.mubr.f32.gmra.mxu0 %v77
    %v167 = vpop.f32.mrf.mxu0
    %v168 = vadd.f32 0.0, %v167
    %v169 = vpop.f32.mrf.mxu0
    %170 = vmatprep.mubr.f32.mxu0 0.0
    %171 = vmatmul.mubr.f32.gmra.mxu0 %v78
    %v172 = vpop.f32.mrf.mxu0
    %v173 = vadd.f32 0.0, %v172
    %v174 = vpop.f32.mrf.mxu0
    %175 = vmatprep.mubr.f32.mxu0 0.0
    %176 = vmatmul.mubr.f32.gmra.mxu0 %v79
    %v177 = vpop.f32.mrf.mxu0
    %v178 = vadd.f32 0.0, %v177
    %v179 = vpop.f32.mrf.mxu0
    %180 = vmatprep.mubr.f32.mxu0 0.0
    %181 = vmatmul.mubr.f32.gmra.mxu0 %v80
    %v182 = vpop.f32.mrf.mxu0
    %v183 = vadd.f32 0.0, %v182
    %v184 = vpop.f32.mrf.mxu0
    %185 = vdwg.mxu0
    %v186 = vadd.f32 %v81, %v168
    %v187 = vadd.f32 %v82, %v173
    %v188 = vadd.f32 %v83, %v178
    %v189 = vadd.f32 %v84, %v183
    %190 = vst [vmem:[#allocation8] sm:$0xff] %v186
    %191 = vst [vmem:[#allocation8 + $0x8] sm:$0xff] %v187
    %192 = vst [vmem:[#allocation8 + $0x10] sm:$0xff] %v188
    %193 = vst [vmem:[#allocation8 + $0x18] sm:$0xff] %v189
    // Predicated region
    $region26: #{tpu_custom_call.1} parent=1 // pred_check
      %p194 = pneg %p46
    $region27: #{tpu_custom_call.1} parent=1 // pred_check_branch
      %196 = sbr.rel (%p194) target = $region29
    $region28: #{tpu_custom_call.1} parent=1 // pred_region
      %v197 = vld [vmem:[#allocation2] sm:$0xff]
      %v198 = vld [vmem:[#allocation2 + $0x8] sm:$0xff]
      %v199 = vld [vmem:[#allocation2 + $0x10] sm:$0xff]
      %v200 = vld [vmem:[#allocation2 + $0x18] sm:$0xff]
      %201 = vadd.xlane.f32.xlu0 %v77
      %v202 = vpop.xlane.xlu0 %201
      %203 = vadd.xlane.f32.xlu0 %v78
      %v204 = vpop.xlane.xlu0 %203
      %205 = vadd.xlane.f32.xlu0 %v79
      %v206 = vpop.xlane.xlu0 %205
      %207 = vadd.xlane.f32.xlu0 %v80
      %v208 = vpop.xlane.xlu0 %207
      %v209 = vadd.f32 %v197, %v202
      %v210 = vadd.f32 %v198, %v204
      %v211 = vadd.f32 %v199, %v206
      %v212 = vadd.f32 %v200, %v208
      %vm213 = vcmask 7168
      %214 = vst.msk [vmem:[#allocation2] sm:$0xff] %vm213, %v209
      %215 = vst.msk [vmem:[#allocation2 + $0x8] sm:$0xff] %vm213, %v210
      %216 = vst.msk [vmem:[#allocation2 + $0x10] sm:$0xff] %vm213, %v211
      %217 = vst.msk [vmem:[#allocation2 + $0x18] sm:$0xff] %vm213, %v212
    $region29: #{tpu_custom_call.1} parent=1 // pred_fallthru
      _
    // Predicated region
    $region30: #{tpu_custom_call.1} parent=1 // pred_check
      %p218 = pneg %p38
    $region31: #{tpu_custom_call.1} parent=1 // pred_check_branch
      %220 = sbr.rel (%p218) target = $region33
    $region32: #{tpu_custom_call.1} parent=1 // pred_region
      %v221 = vld [vmem:[#allocation2] sm:$0xff]
      %v222 = vld [vmem:[#allocation2 + $0x8] sm:$0xff]
      %v223 = vld [vmem:[#allocation2 + $0x10] sm:$0xff]
      %v224 = vld [vmem:[#allocation2 + $0x18] sm:$0xff]
      %vm225 = vcmp.gt.f32.partialorder %v221, 0.0
      %vm226 = vcmp.gt.f32.partialorder %v222, 0.0
      %vm227 = vcmp.gt.f32.partialorder %v223, 0.0
      %vm228 = vcmp.gt.f32.partialorder %v224, 0.0
      %v229 = vrcp.pop %v221
      %v230 = vmul.f32 1.0, %v229
      %v231 = vrcp.pop %v222
      %v232 = vmul.f32 1.0, %v231
      %v233 = vrcp.pop %v223
      %v234 = vmul.f32 1.0, %v233
      %v235 = vrcp.pop %v224
      %v236 = vmul.f32 1.0, %v235
      %v237 = vsel %vm225, %v230, 0.0
      %v238 = vsel %vm226, %v232, 0.0
      %v239 = vsel %vm227, %v234, 0.0
      %v240 = vsel %vm228, %v236, 0.0
      %v241 = vld [vmem:[#allocation8] sm:$0xff]
      %v242 = vld [vmem:[#allocation8 + $0x8] sm:$0xff]
      %v243 = vld [vmem:[#allocation8 + $0x10] sm:$0xff]
      %v244 = vld [vmem:[#allocation8 + $0x18] sm:$0xff]
      %246 = vset.pattern.permute.xlu0 0
      %247 = vperm.xlu0 %246, %v237
      %v248 = vpop.permute.xlu0 %247
      %251 = vset.pattern.permute.xlu0 0
      %252 = vperm.xlu0 %251, %v238
      %v253 = vpop.permute.xlu0 %252
      %256 = vset.pattern.permute.xlu0 0
      %257 = vperm.xlu0 %256, %v239
      %v258 = vpop.permute.xlu0 %257
      %261 = vset.pattern.permute.xlu0 0
      %262 = vperm.xlu0 %261, %v240
      %v263 = vpop.permute.xlu0 %262
      %v265 = vmul.f32 %v241, %v248
      %v266 = vmul.f32 %v242, %v253
      %v267 = vmul.f32 %v243, %v258
      %v268 = vmul.f32 %v244, %v263
      %269 = vst [vmem:[#allocation8] sm:$0xff] %v265
      %270 = vst [vmem:[#allocation8 + $0x8] sm:$0xff] %v266
      %271 = vst [vmem:[#allocation8 + $0x10] sm:$0xff] %v267
      %272 = vst [vmem:[#allocation8 + $0x18] sm:$0xff] %v268
    $region33: #{tpu_custom_call.1} parent=1 // pred_fallthru
      _
    // Predicated region
    $region34: #{tpu_custom_call.1} parent=1 // pred_check
      _
    $region35: #{tpu_custom_call.1} parent=1 // pred_check_branch
      %274 = sbr.rel (0) target = $region37
    $region36: #{tpu_custom_call.1} parent=1 // pred_region
      %s276 = ssub.s32 512, 512
      %277 = vsyncadd [#allocation5], %s276
      %s278 = sshll.u32 [#allocation8], 4
      %s279 = int_to_ptr.vmem [resolvable:$true] %s278
      %284 = dma.vmem_to_hbm [thread:$0]  %s279, 512, %s2, [#allocation5], 128, 128, 8
    $region37: #{tpu_custom_call.1} parent=1 // pred_fallthru
      _
    // Predicated region
    $region38: #{tpu_custom_call.1} parent=1 // pred_check
      _
    $region39: #{tpu_custom_call.1} parent=1 // pred_check_branch
      %286 = sbr.rel (0) target = $region41
    $region40: #{tpu_custom_call.1} parent=1 // pred_region
      %287 = dma.done [#allocation5], 512
    $region41: #{tpu_custom_call.1} parent=1 // pred_fallthru
      _
    %288 = vsyncpa [#allocation4], 1
    %289 = vsyncpa [#allocation7], 1
    %290 = vsyncpa [#allocation5], 1

</llo_original>
